<compile_context>
chip_gen: v5e
topology: v5e:2x2
jax: 0.10.0
libtpu: 0.0.40
codegen_flags: <defaults>
</compile_context>

<pallas_src>
import functools
import math

import jax
import jax.numpy as jnp
from jax.experimental import pallas as pl
from jax.experimental.pallas import tpu as pltpu


def _round_up(x, m):
    return (x + m - 1) // m * m


# ---------------------------------------------------------------------------
# Per-generation kernel configuration (tile_m x tile_h picked so the hidden
# loop is MXU-bound rather than HBM-bound on weight streaming).
# ---------------------------------------------------------------------------
_GEN_CONFIGS = {
    "v7x": dict(tile_m=512, tile_h=256, vmem_limit_bytes=56 * 2**20, split_d=True),
    "v6e": dict(tile_m=1024, tile_h=512, vmem_limit_bytes=100 * 2**20, split_d=False),
    "v5e": dict(tile_m=512, tile_h=512, vmem_limit_bytes=100 * 2**20, split_d=False),
    "v5p": dict(tile_m=512, tile_h=512, vmem_limit_bytes=96 * 2**20, split_d=False),
    "unknown": dict(tile_m=512, tile_h=512, vmem_limit_bytes=64 * 2**20, split_d=False),
}


def _detect_generation():
    try:
        kind = jax.devices()[0].device_kind.lower()
    except Exception:
        return "unknown"
    if "v7" in kind:
        return "v7x"
    if "v6" in kind:
        return "v6e"
    if "v5" in kind:
        return "v5e" if ("lite" in kind or "5e" in kind) else "v5p"
    return "unknown"


def get_ffn_config():
    return dict(_GEN_CONFIGS[_detect_generation()])


# ---------------------------------------------------------------------------
# Kernel
# ---------------------------------------------------------------------------
def _ffn_kernel(x_ref, w13_ref, w2_ref, o_ref, acc_ref, *, tile_h):
    """One grid step = (row tile i, out-column tile j, hidden tile k).

      x_ref   : (tile_m, D)          activation row tile (resident over j, k)
      w13_ref : (D, 2*tile_h)        [w1 tile k | w3 tile k] (pre-transposed, fused)
      w2_ref  : (tile_h, tile_d)     hidden tile k / column tile j of w2^T
      o_ref   : (tile_m, tile_d)     output tile (written on last hidden step)
      acc_ref : (tile_m, tile_d) f32 accumulator over hidden tiles
    """
    k = pl.program_id(2)

    @pl.when(k == 0)
    def _():
        acc_ref[...] = jnp.zeros_like(acc_ref)

    # One wide MXU contraction covering both the w1 and w3 projections.
    h = jnp.dot(x_ref[...], w13_ref[...], preferred_element_type=jnp.float32)
    h1 = h[:, :tile_h]            # x @ w1^T  (static, lane-aligned slice)
    h3 = h[:, tile_h:]            # x @ w3^T
    gated = (h1 * jax.nn.sigmoid(h1)) * h3        # SiLU(h1) * h3

    acc_ref[...] += jnp.dot(
        gated.astype(w2_ref.dtype), w2_ref[...], preferred_element_type=jnp.float32
    )

    @pl.when(k == pl.num_programs(2) - 1)
    def _():
        o_ref[...] = acc_ref[...].astype(o_ref.dtype)


@functools.partial(
    jax.jit, static_argnames=("tile_m", "tile_h", "split_d", "vmem_limit_bytes")
)
def _ffn_forward(x, w13, w2_k, *, tile_m, tile_h, split_d, vmem_limit_bytes):
    """x: [..., D];  w13: [D, 2*Hp] fused slab;  w2_k: [Hp, D] (= w2^T, padded)."""
    *lead, D = x.shape
    M = math.prod(lead) if lead else 1
    Hp = w2_k.shape[0]
    dtype = x.dtype

    # Row tiling: keep the configured (multiple-of-128) tile when M allows;
    # otherwise a single full-row tile (tiny M is weight-bound regardless).
    tm = tile_m if M >= tile_m else _round_up(M, 16)
    Mp = _round_up(M, tm)
    n_m = Mp // tm
    n_h = Hp // tile_h

    # Optional split of the output D columns across a second *parallel* axis
    # (gives v7x's second TensorCore work for decode shapes where n_m == 1).
    n_d = 2 if (split_d and n_m == 1 and D % 256 == 0) else 1
    tile_d = D // n_d

    x2d = x.reshape(M, D)
    if Mp != M:
        x2d = jnp.pad(x2d, ((0, Mp - M), (0, 0)))     # zero rows contribute 0

    itemsize = jnp.dtype(dtype).itemsize
    cost = pl.CostEstimate(
        flops=6 * Mp * Hp * D,
        transcendentals=Mp * Hp,
        # Weights are re-streamed once per row tile.
        bytes_accessed=(2 * Mp * D + n_m * 3 * Hp * D) * itemsize,
    )

    out2d = pl.pallas_call(
        functools.partial(_ffn_kernel, tile_h=tile_h),
        out_shape=jax.ShapeDtypeStruct((Mp, D), dtype),
        grid_spec=pltpu.PrefetchScalarGridSpec(
            num_scalar_prefetch=0,
            grid=(n_m, n_d, n_h),                       # rows, out-cols, hidden
            in_specs=[
                pl.BlockSpec((tm, D), lambda i, j, k: (i, 0)),           # x rows
                pl.BlockSpec((D, 2 * tile_h), lambda i, j, k: (0, k)),   # [w1|w3]
                pl.BlockSpec((tile_h, tile_d), lambda i, j, k: (k, j)),  # w2^T
            ],
            out_specs=pl.BlockSpec((tm, tile_d), lambda i, j, k: (i, j)),
            scratch_shapes=[pltpu.VMEM((tm, tile_d), jnp.float32)],
        ),
        compiler_params=pltpu.CompilerParams(
            # rows / out-cols -> parallel (megacore), hidden -> reduction
            dimension_semantics=("parallel", "parallel", "arbitrary"),
            vmem_limit_bytes=vmem_limit_bytes,
        ),
        cost_estimate=cost,
    )(x2d, w13, w2_k)

    return out2d[:M].reshape(x.shape)


# ---------------------------------------------------------------------------
# Module-like wrapper: one-time weight preparation at construction.
# ---------------------------------------------------------------------------
class FeedForwardPallas:
    """SwiGLU FFN with weights re-laid-out ONCE at construction.

      w1 : [H, D]   (nn.Linear layout: out_features x in_features)
      w2 : [D, H]
      w3 : [H, D]
    """

    def __init__(self, w1, w2, w3, *, param_dtype=None, config=None):
        cfg = dict(config) if config is not None else get_ffn_config()
        w1 = jnp.asarray(w1)
        w2 = jnp.asarray(w2)
        w3 = jnp.asarray(w3)
        H, D = w1.shape
        assert w3.shape == (H, D) and w2.shape == (D, H)
        dtype = jnp.dtype(param_dtype) if param_dtype is not None else w1.dtype

        tile_h = int(min(cfg["tile_h"], _round_up(H, 128)))
        Hp = _round_up(H, tile_h)
        n_h = Hp // tile_h

        # One-time re-layout (NOT in the per-call jitted path): transpose,
        # zero-pad hidden to Hp (padded hidden units contribute exactly 0),
        # and fuse w1/w3 so hidden tile k occupies one contiguous
        # [D, 2*tile_h] slab: cols [0,tile_h)=w1 tile k, [tile_h,2*tile_h)=w3.
        w1_t = w1.T.astype(dtype)            # [D, H]
        w3_t = w3.T.astype(dtype)            # [D, H]
        w2_k = w2.T.astype(dtype)            # [H, D]
        if Hp != H:
            w1_t = jnp.pad(w1_t, ((0, 0), (0, Hp - H)))
            w3_t = jnp.pad(w3_t, ((0, 0), (0, Hp - H)))
            w2_k = jnp.pad(w2_k, ((0, Hp - H), (0, 0)))
        w13 = jnp.concatenate(
            (w1_t.reshape(D, n_h, tile_h), w3_t.reshape(D, n_h, tile_h)), axis=2
        ).reshape(D, 2 * Hp)

        self.w13 = jax.block_until_ready(w13)
        self.w2_k = jax.block_until_ready(w2_k)
        self.dtype = dtype
        self.D, self.H, self.Hp = D, H, Hp
        self.tile_m = int(cfg["tile_m"])
        self.tile_h = tile_h
        self.split_d = bool(cfg["split_d"])
        self.vmem_limit_bytes = int(cfg["vmem_limit_bytes"])
        # NOTE: on v5e, if profiling still shows exposed weight DMA, set
        # pipeline_mode=pl.Buffered(3) on the two weight BlockSpecs (there is
        # VMEM headroom at 128 MiB); do NOT do this on v7x (64 MiB budget).

    def __call__(self, x):
        x = jnp.asarray(x, dtype=self.dtype)
        return _ffn_forward(
            x, self.w13, self.w2_k,
            tile_m=self.tile_m, tile_h=self.tile_h,
            split_d=self.split_d, vmem_limit_bytes=self.vmem_limit_bytes,
        )


def _hidden_size(dim, multiple_of=256, ffn_dim_multiplier=None):
    # Mirrors FeedForward.__init__ exactly (same expression / precedence).
    hidden = 4 * dim
    hidden = int(2 * hidden // 3)
    if ffn_dim_multiplier is not None:
        hidden = int(hidden * ffn_dim_multiplier)
    return multiple_of * ((hidden + multiple_of - 1) // multiple_of)


if __name__ == "__main__":
    def ref_ffn(xa, wa1, wa2, wa3):
        h = jax.nn.silu(jnp.einsum("bsd,hd->bsh", xa, wa1, precision="highest"))
        h = h * jnp.einsum("bsd,hd->bsh", xa, wa3, precision="highest")
        return jnp.einsum("bsh,dh->bsd", h, wa2, precision="highest")

    # --- case 1: dim=128 (H=512), f32, auto per-generation config ----------
    batch, seq, dim = 2, 8, 128
    hidden = _hidden_size(dim)                     # 512 (module rounding rule)
    key = jax.random.PRNGKey(0)
    kx, k1, k2, k3 = jax.random.split(key, 4)
    x = jax.random.normal(kx, (batch, seq, dim), dtype=jnp.float32)
    w1 = jax.random.normal(k1, (hidden, dim), dtype=jnp.float32) * 0.02
    w2 = jax.random.normal(k2, (dim, hidden), dtype=jnp.float32) * 0.02
    w3 = jax.random.normal(k3, (hidden, dim), dtype=jnp.float32) * 0.02

    ffn = FeedForwardPallas(w1, w2, w3)
    out = jax.block_until_ready(ffn(x))
    ref = ref_ffn(x, w1, w2, w3)
    assert out.shape == (batch, seq, dim)
    err1 = float(jnp.max(jnp.abs(out - ref)))
    assert jnp.allclose(out, ref, atol=1e-3, rtol=1e-3), err1

    # --- case 2: dim=256 (H=768), tiny tiles -> multiple row & hidden tiles --
    dim2 = 256
    hidden2 = _hidden_size(dim2)                   # 768
    k2x, k21, k22, k23 = jax.random.split(jax.random.PRNGKey(1), 4)
    x2 = jax.random.normal(k2x, (batch, seq, dim2), dtype=jnp.float32)
    w1b = jax.random.normal(k21, (hidden2, dim2), dtype=jnp.float32) * 0.02
    w2b = jax.random.normal(k22, (dim2, hidden2), dtype=jnp.float32) * 0.02
    w3b = jax.random.normal(k23, (hidden2, dim2), dtype=jnp.float32) * 0.02

    small_cfg = dict(tile_m=8, tile_h=256, vmem_limit_bytes=64 * 2**20, split_d=False)
    ffn2 = FeedForwardPallas(w1b, w2b, w3b, config=small_cfg)
    out2 = jax.block_until_ready(ffn2(x2))
    ref2 = ref_ffn(x2, w1b, w2b, w3b)
    err2 = float(jnp.max(jnp.abs(out2 - ref2)))
    assert jnp.allclose(out2, ref2, atol=1e-3, rtol=1e-3), err2

    # --- case 3: output-column split (v7x dual-TC decode path) + padded
    #             hidden tile (H=768 -> Hp=1024 with tile_h=512) --------------
    split_cfg = dict(tile_m=64, tile_h=512, vmem_limit_bytes=64 * 2**20, split_d=True)
    ffn3 = FeedForwardPallas(w1b, w2b, w3b, config=split_cfg)
    out3 = jax.block_until_ready(ffn3(x2))
    err3 = float(jnp.max(jnp.abs(out3 - ref2)))
    assert jnp.allclose(out3, ref2, atol=1e-3, rtol=1e-3), err3

    # --- case 4: bf16 resident weights + bf16 activations (production path) -
    ffn_bf16 = FeedForwardPallas(w1, w2, w3, param_dtype=jnp.bfloat16)
    out_bf16 = jax.block_until_ready(ffn_bf16(x.astype(jnp.bfloat16)))
    assert out_bf16.dtype == jnp.bfloat16
    assert jnp.allclose(out_bf16.astype(jnp.float32), ref, atol=3e-2, rtol=3e-1)

    print("KERNEL_OK")
</pallas_src>

<mosaic_0001>
module attributes {stable_mosaic.version = 11 : i64} {
  func.func @_ffn_kernel(%arg0: i32, %arg1: i32, %arg2: i32, %arg3: memref<16x128xf32, #tpu.memory_space<vmem>>, %arg4: memref<128x1024xf32, #tpu.memory_space<vmem>>, %arg5: memref<512x128xf32, #tpu.memory_space<vmem>>, %arg6: memref<16x128xf32, #tpu.memory_space<vmem>>, %arg7: memref<16x128xf32, #tpu.memory_space<vmem>>) attributes {dimension_semantics = [#tpu.dimension_semantics<parallel>, #tpu.dimension_semantics<parallel>, #tpu.dimension_semantics<arbitrary>], iteration_bounds = array<i64: 1, 1, 1>, scalar_prefetch = 0 : i64, scratch_operands = 1 : i64, tpu.core_type = #tpu.core_type<tc>, window_params = [{transform_indices = @transform_0, window_bounds = array<i64: 16, 128>}, {transform_indices = @transform_1, window_bounds = array<i64: 128, 1024>}, {transform_indices = @transform_2, window_bounds = array<i64: 512, 128>}, {transform_indices = @transform_3, window_bounds = array<i64: 16, 128>}]} {
    %c0_i32 = arith.constant 0 : i32
    %0 = arith.cmpi eq, %arg2, %c0_i32 : i32
    %1 = arith.extui %0 : i1 to i32
    %c0_i32_0 = arith.constant 0 : i32
    %2 = arith.cmpi ne, %1, %c0_i32_0 : i32
    scf.if %2 {
      %cst_14 = arith.constant 0.000000e+00 : f32
      %23 = vector.broadcast %cst_14 : f32 to vector<16x128xf32>
      %c0_15 = arith.constant 0 : index
      %c0_16 = arith.constant 0 : index
      %24 = vector.load %arg7[%c0_15, %c0_16] : memref<16x128xf32, #tpu.memory_space<vmem>>, vector<16x128xf32>
      tpu.vector_store %arg7[%c0_15, %c0_16], %23 {strides = array<i32>} : memref<16x128xf32, #tpu.memory_space<vmem>>, vector<16x128xf32>,
    } else {
    }
    %c0 = arith.constant 0 : index
    %c0_1 = arith.constant 0 : index
    %3 = vector.load %arg3[%c0, %c0_1] : memref<16x128xf32, #tpu.memory_space<vmem>>, vector<16x128xf32>
    %c0_2 = arith.constant 0 : index
    %c0_3 = arith.constant 0 : index
    %4 = vector.load %arg4[%c0_2, %c0_3] : memref<128x1024xf32, #tpu.memory_space<vmem>>, vector<128x1024xf32>
    %cst = arith.constant dense<0.000000e+00> : vector<16x1024xf32>
    %5 = tpu.matmul %3, %4, %cst {dimension_numbers = #tpu.dot_dimension_numbers<[1], [0], [0], [1], [0, 0, 1, 1], [], []>} : vector<16x128xf32>, vector<128x1024xf32>, vector<16x1024xf32> -> vector<16x1024xf32>
    %6 = vector.extract_strided_slice %5 {offsets = [0, 0], sizes = [16, 512], strides = [1, 1]} : vector<16x1024xf32> to vector<16x512xf32>
    %7 = vector.extract_strided_slice %5 {offsets = [0, 512], sizes = [16, 512], strides = [1, 1]} : vector<16x1024xf32> to vector<16x512xf32>
    %8 = arith.negf %6 : vector<16x512xf32>
    %9 = math.exp %8 : vector<16x512xf32>
    %cst_4 = arith.constant 1.000000e+00 : f32
    %10 = vector.broadcast %cst_4 : f32 to vector<16x512xf32>
    %11 = arith.addf %10, %9 : vector<16x512xf32>
    %12 = arith.divf %10, %11 : vector<16x512xf32>
    %13 = arith.mulf %6, %12 : vector<16x512xf32>
    %14 = arith.mulf %13, %7 : vector<16x512xf32>
    %c0_5 = arith.constant 0 : index
    %c0_6 = arith.constant 0 : index
    %15 = vector.load %arg7[%c0_5, %c0_6] : memref<16x128xf32, #tpu.memory_space<vmem>>, vector<16x128xf32>
    %c0_7 = arith.constant 0 : index
    %c0_8 = arith.constant 0 : index
    %16 = vector.load %arg5[%c0_7, %c0_8] : memref<512x128xf32, #tpu.memory_space<vmem>>, vector<512x128xf32>
    %cst_9 = arith.constant dense<0.000000e+00> : vector<16x128xf32>
    %17 = tpu.matmul %14, %16, %cst_9 {dimension_numbers = #tpu.dot_dimension_numbers<[1], [0], [0], [1], [0, 0, 1, 1], [], []>} : vector<16x512xf32>, vector<512x128xf32>, vector<16x128xf32> -> vector<16x128xf32>
    %18 = arith.addf %15, %17 : vector<16x128xf32>
    %c0_10 = arith.constant 0 : index
    %c0_11 = arith.constant 0 : index
    %19 = vector.load %arg7[%c0_10, %c0_11] : memref<16x128xf32, #tpu.memory_space<vmem>>, vector<16x128xf32>
    tpu.vector_store %arg7[%c0_10, %c0_11], %18 {strides = array<i32>} : memref<16x128xf32, #tpu.memory_space<vmem>>, vector<16x128xf32>,
    %c0_i32_12 = arith.constant 0 : i32
    %20 = arith.cmpi eq, %arg2, %c0_i32_12 : i32
    %21 = arith.extui %20 : i1 to i32
    %c0_i32_13 = arith.constant 0 : i32
    %22 = arith.cmpi ne, %21, %c0_i32_13 : i32
    scf.if %22 {
      %c0_14 = arith.constant 0 : index
      %c0_15 = arith.constant 0 : index
      %23 = vector.load %arg7[%c0_14, %c0_15] : memref<16x128xf32, #tpu.memory_space<vmem>>, vector<16x128xf32>
      %c0_16 = arith.constant 0 : index
      %c0_17 = arith.constant 0 : index
      %24 = vector.load %arg6[%c0_16, %c0_17] : memref<16x128xf32, #tpu.memory_space<vmem>>, vector<16x128xf32>
      tpu.vector_store %arg6[%c0_16, %c0_17], %23 {strides = array<i32>} : memref<16x128xf32, #tpu.memory_space<vmem>>, vector<16x128xf32>,
    } else {
    }
    return
  }
  func.func @transform_0(%arg0: i32, %arg1: i32, %arg2: i32) -> (i32, i32) {
    %c0_i32 = arith.constant 0 : i32
    %c0_i32_0 = arith.constant 0 : i32
    return %arg0, %c0_i32 : i32, i32
  }
  func.func @transform_1(%arg0: i32, %arg1: i32, %arg2: i32) -> (i32, i32) {
    %c0_i32 = arith.constant 0 : i32
    %c0_i32_0 = arith.constant 0 : i32
    return %c0_i32, %arg2 : i32, i32
  }
  func.func @transform_2(%arg0: i32, %arg1: i32, %arg2: i32) -> (i32, i32) {
    %c0_i32 = arith.constant 0 : i32
    return %arg2, %arg1 : i32, i32
  }
  func.func @transform_3(%arg0: i32, %arg1: i32, %arg2: i32) -> (i32, i32) {
    %c0_i32 = arith.constant 0 : i32
    return %arg0, %arg1 : i32, i32
  }
}

</mosaic_0001>

<llo_original>
// kernel: _ffn_forward.1
$region0: #{_ffn_forward.1}
  #allocation0 [shape = 'u32[]', space=smem, size = 0x4, offset = 0x4, fixed_abs, tag = 'smem constant byte address 0x4 - core index']
  #allocation1 [shape = 'u32[72,128]{1,0:T(1,128)}', space=vmem, size = 0x9000, scoped, tag = 'internal scratch']
  #allocation2 [shape = 'f32[16,128]{1,0:T(8,128)}', space=vmem, size = 0x2000, scoped, tag = 'scratch operand']
  %s0 = inlined_call_operand.hbm [shape: f32[16,128], index: 0, kind: input, shape index: {}]
  %s1 = inlined_call_operand.hbm [shape: f32[128,1024], index: 1, kind: input, shape index: {}]
  %s2 = inlined_call_operand.hbm [shape: f32[512,128], index: 2, kind: input, shape index: {}]
  %s3 = inlined_call_operand.hbm [shape: f32[16,128], index: 3, kind: output, shape index: {}]
  %s4 = sld [smem:[#allocation0]]
  $region42: #{_ffn_forward.1} parent=0
    _
  %s6 = ssub.s32 1, %s4
  %s7 = scalar_select 0, %s6, %s4
  $region1: #{_ffn_forward.1} parent=0
    #allocation3 [shape = 'u8[8192]{0}', space=vmem, size = 0x2000, scoped, tag = 'input window, operand 0, single buffered']
    #allocation4 [shape = 's32[1]{0}', space=sflag, size = 0x4, scoped, tag = 'scoped memory for _ffn_forward.1']
    #allocation5 [shape = 's32[1]{0}', space=sflag, size = 0x4, scoped, tag = 'scoped memory for _ffn_forward.1']
    #allocation6 [shape = 'u8[524288]{0}', space=vmem, size = 0x80000, scoped, tag = 'input window, operand 1, single buffered']
    #allocation7 [shape = 's32[1]{0}', space=sflag, size = 0x4, scoped, tag = 'scoped memory for _ffn_forward.1']
    #allocation8 [shape = 'u8[262144]{0}', space=vmem, size = 0x40000, scoped, tag = 'input window, operand 2, single buffered']
    #allocation9 [shape = 'u8[8192]{0}', space=vmem, size = 0x2000, scoped, tag = 'output window, operand 0, single buffered']
    %8 = vsyncpa [#allocation4], 0
    %9 = vsyncpa [#allocation7], 0
    %10 = vsyncpa [#allocation5], 0
    // Predicated region
    $region2: #{_ffn_forward.1} parent=1 // pred_check
      _
    $region3: #{_ffn_forward.1} parent=1 // pred_check_branch
      %12 = sbr.rel (0) target = $region5
    $region4: #{_ffn_forward.1} parent=1 // pred_region
      %14 = vsyncadd [#allocation4], 0
      %s15 = sshll.u32 %s0, 4
      %s16 = int_to_ptr.hbm [resolvable:$true] %s15
      %s17 = sshll.u32 [#allocation3], 4
      %s18 = int_to_ptr.vmem [resolvable:$true] %s17
      %23 = dma.hbm_to_vmem [thread:$0]  %s16, 256, %s18, [#allocation4], 128, 128, 8
    $region5: #{_ffn_forward.1} parent=1 // pred_fallthru
      _
    // Predicated region
    $region6: #{_ffn_forward.1} parent=1 // pred_check
      _
    $region7: #{_ffn_forward.1} parent=1 // pred_check_branch
      %25 = sbr.rel (0) target = $region9
    $region8: #{_ffn_forward.1} parent=1 // pred_region
      %27 = vsyncadd [#allocation7], 0
      %s28 = sshll.u32 %s1, 4
      %s29 = int_to_ptr.hbm [resolvable:$true] %s28
      %s30 = sshll.u32 [#allocation6], 4
      %s31 = int_to_ptr.vmem [resolvable:$true] %s30
      %36 = dma.hbm_to_vmem [thread:$0]  %s29, 16384, %s31, [#allocation7], 1024, 1024, 64
    $region9: #{_ffn_forward.1} parent=1 // pred_fallthru
      _
    // Predicated region
    $region10: #{_ffn_forward.1} parent=1 // pred_check
      _
    $region11: #{_ffn_forward.1} parent=1 // pred_check_branch
      %38 = sbr.rel (0) target = $region13
    $region12: #{_ffn_forward.1} parent=1 // pred_region
      %40 = vsyncadd [#allocation7], 0
      %s41 = sshll.u32 %s2, 4
      %s42 = int_to_ptr.hbm [resolvable:$true] %s41
      %s43 = sshll.u32 [#allocation8], 4
      %s44 = int_to_ptr.vmem [resolvable:$true] %s43
      %49 = dma.hbm_to_vmem [thread:$0]  %s42, 8192, %s44, [#allocation7], 128, 128, 8
    $region13: #{_ffn_forward.1} parent=1 // pred_fallthru
      _
    // Predicated region
    $region14: #{_ffn_forward.1} parent=1 // pred_check
      _
    $region15: #{_ffn_forward.1} parent=1 // pred_check_branch
      %51 = sbr.rel (0) target = $region17
    $region16: #{_ffn_forward.1} parent=1 // pred_region
      %53 = dma.done [#allocation4], 256
    $region17: #{_ffn_forward.1} parent=1 // pred_fallthru
      _
    // Predicated region
    $region18: #{_ffn_forward.1} parent=1 // pred_check
      _
    $region19: #{_ffn_forward.1} parent=1 // pred_check_branch
      %55 = sbr.rel (0) target = $region21
    $region20: #{_ffn_forward.1} parent=1 // pred_region
      %57 = dma.done [#allocation7], 16384
    $region21: #{_ffn_forward.1} parent=1 // pred_fallthru
      _
    // Predicated region
    $region22: #{_ffn_forward.1} parent=1 // pred_check
      _
    $region23: #{_ffn_forward.1} parent=1 // pred_check_branch
      %59 = sbr.rel (0) target = $region25
    $region24: #{_ffn_forward.1} parent=1 // pred_region
      %61 = dma.done [#allocation7], 8192
    $region25: #{_ffn_forward.1} parent=1 // pred_fallthru
      _
    %p62 = scmp.eq.s32.totalorder 0, 0
    // Predicated region
    $region26: #{_ffn_forward.1} parent=1 // pred_check
      %p63 = pneg %p62
    $region27: #{_ffn_forward.1} parent=1 // pred_check_branch
      %65 = sbr.rel (%p63) target = $region29
    $region28: #{_ffn_forward.1} parent=1 // pred_region
      %66 = vst [vmem:[#allocation2] sm:$0xff] 0.0
      %67 = vst [vmem:[#allocation2 + $0x8] sm:$0xff] 0.0
    $region29: #{_ffn_forward.1} parent=1 // pred_fallthru
      _
    %v68 = vld [vmem:[#allocation3] sm:$0xff]
    %v69 = vld [vmem:[#allocation3 + $0x8] sm:$0xff]
    %v70 = vld [vmem:[#allocation6] sm:$0xff]
    %v71 = vld [vmem:[#allocation6 + $0x8] sm:$0xff]
    %v72 = vld [vmem:[#allocation6 + $0x10] sm:$0xff]
    %v73 = vld [vmem:[#allocation6 + $0x18] sm:$0xff]
    %v74 = vld [vmem:[#allocation6 + $0x20] sm:$0xff]
    %v75 = vld [vmem:[#allocation6 + $0x28] sm:$0xff]
    %v76 = vld [vmem:[#allocation6 + $0x30] sm:$0xff]
    %v77 = vld [vmem:[#allocation6 + $0x38] sm:$0xff]
    %v78 = vld [vmem:[#allocation6 + $0x40] sm:$0xff]
    %v79 = vld [vmem:[#allocation6 + $0x48] sm:$0xff]
    %v80 = vld [vmem:[#allocation6 + $0x50] sm:$0xff]
    %v81 = vld [vmem:[#allocation6 + $0x58] sm:$0xff]
    %v82 = vld [vmem:[#allocation6 + $0x60] sm:$0xff]
    %v83 = vld [vmem:[#allocation6 + $0x68] sm:$0xff]
    %v84 = vld [vmem:[#allocation6 + $0x70] sm:$0xff]
    %v85 = vld [vmem:[#allocation6 + $0x78] sm:$0xff]
    %v86 = vld [vmem:[#allocation6 + $0x80] sm:$0xff]
    %v87 = vld [vmem:[#allocation6 + $0x88] sm:$0xff]
    %v88 = vld [vmem:[#allocation6 + $0x90] sm:$0xff]
    %v89 = vld [vmem:[#allocation6 + $0x98] sm:$0xff]
    %v90 = vld [vmem:[#allocation6 + $0xa0] sm:$0xff]
    %v91 = vld [vmem:[#allocation6 + $0xa8] sm:$0xff]
    %v92 = vld [vmem:[#allocation6 + $0xb0] sm:$0xff]
    %v93 = vld [vmem:[#allocation6 + $0xb8] sm:$0xff]
    %v94 = vld [vmem:[#allocation6 + $0xc0] sm:$0xff]
    %v95 = vld [vmem:[#allocation6 + $0xc8] sm:$0xff]
    %v96 = vld [vmem:[#allocation6 + $0xd0] sm:$0xff]
    %v97 = vld [vmem:[#allocation6 + $0xd8] sm:$0xff]
    %v98 = vld [vmem:[#allocation6 + $0xe0] sm:$0xff]
    %v99 = vld [vmem:[#allocation6 + $0xe8] sm:$0xff]
    %v100 = vld [vmem:[#allocation6 + $0xf0] sm:$0xff]
    %v101 = vld [vmem:[#allocation6 + $0xf8] sm:$0xff]
    %v102 = vld [vmem:[#allocation6 + $0x100] sm:$0xff]
    %v103 = vld [vmem:[#allocation6 + $0x108] sm:$0xff]
    %v104 = vld [vmem:[#allocation6 + $0x110] sm:$0xff]
    %v105 = vld [vmem:[#allocation6 + $0x118] sm:$0xff]
    %v106 = vld [vmem:[#allocation6 + $0x120] sm:$0xff]
    %v107 = vld [vmem:[#allocation6 + $0x128] sm:$0xff]
    %v108 = vld [vmem:[#allocation6 + $0x130] sm:$0xff]
    %v109 = vld [vmem:[#allocation6 + $0x138] sm:$0xff]
    %v110 = vld [vmem:[#allocation6 + $0x140] sm:$0xff]
    %v111 = vld [vmem:[#allocation6 + $0x148] sm:$0xff]
    %v112 = vld [vmem:[#allocation6 + $0x150] sm:$0xff]
    %v113 = vld [vmem:[#allocation6 + $0x158] sm:$0xff]
    %v114 = vld [vmem:[#allocation6 + $0x160] sm:$0xff]
    %v115 = vld [vmem:[#allocation6 + $0x168] sm:$0xff]
    %v116 = vld [vmem:[#allocation6 + $0x170] sm:$0xff]
    %v117 = vld [vmem:[#allocation6 + $0x178] sm:$0xff]
    %v118 = vld [vmem:[#allocation6 + $0x180] sm:$0xff]
    %v119 = vld [vmem:[#allocation6 + $0x188] sm:$0xff]
    %v120 = vld [vmem:[#allocation6 + $0x190] sm:$0xff]
    %v121 = vld [vmem:[#allocation6 + $0x198] sm:$0xff]
    %v122 = vld [vmem:[#allocation6 + $0x1a0] sm:$0xff]
    %v123 = vld [vmem:[#allocation6 + $0x1a8] sm:$0xff]
    %v124 = vld [vmem:[#allocation6 + $0x1b0] sm:$0xff]
    %v125 = vld [vmem:[#allocation6 + $0x1b8] sm:$0xff]
    %v126 = vld [vmem:[#allocation6 + $0x1c0] sm:$0xff]
    %v127 = vld [vmem:[#allocation6 + $0x1c8] sm:$0xff]
    %v128 = vld [vmem:[#allocation6 + $0x1d0] sm:$0xff]
    %v129 = vld [vmem:[#allocation6 + $0x1d8] sm:$0xff]
    %v130 = vld [vmem:[#allocation6 + $0x1e0] sm:$0xff]
    %v131 = vld [vmem:[#allocation6 + $0x1e8] sm:$0xff]
    %v132 = vld [vmem:[#allocation6 + $0x1f0] sm:$0xff]
    %v133 = vld [vmem:[#allocation6 + $0x1f8] sm:$0xff]
    %v134 = vld [vmem:[#allocation6 + $0x200] sm:$0xff]
    %v135 = vld [vmem:[#allocation6 + $0x208] sm:$0xff]
    %v136 = vld [vmem:[#allocation6 + $0x210] sm:$0xff]
    %v137 = vld [vmem:[#allocation6 + $0x218] sm:$0xff]
    %v138 = vld [vmem:[#allocation6 + $0x220] sm:$0xff]
    %v139 = vld [vmem:[#allocation6 + $0x228] sm:$0xff]
    %v140 = vld [vmem:[#allocation6 + $0x230] sm:$0xff]
    %v141 = vld [vmem:[#allocation6 + $0x238] sm:$0xff]
    %v142 = vld [vmem:[#allocation6 + $0x240] sm:$0xff]
    %v143 = vld [vmem:[#allocation6 + $0x248] sm:$0xff]
    %v144 = vld [vmem:[#allocation6 + $0x250] sm:$0xff]
    %v145 = vld [vmem:[#allocation6 + $0x258] sm:$0xff]
    %v146 = vld [vmem:[#allocation6 + $0x260] sm:$0xff]
    %v147 = vld [vmem:[#allocation6 + $0x268] sm:$0xff]
    %v148 = vld [vmem:[#allocation6 + $0x270] sm:$0xff]
    %v149 = vld [vmem:[#allocation6 + $0x278] sm:$0xff]
    %v150 = vld [vmem:[#allocation6 + $0x280] sm:$0xff]
    %v151 = vld [vmem:[#allocation6 + $0x288] sm:$0xff]
    %v152 = vld [vmem:[#allocation6 + $0x290] sm:$0xff]
    %v153 = vld [vmem:[#allocation6 + $0x298] sm:$0xff]
    %v154 = vld [vmem:[#allocation6 + $0x2a0] sm:$0xff]
    %v155 = vld [vmem:[#allocation6 + $0x2a8] sm:$0xff]
    %v156 = vld [vmem:[#allocation6 + $0x2b0] sm:$0xff]
    %v157 = vld [vmem:[#allocation6 + $0x2b8] sm:$0xff]
    %v158 = vld [vmem:[#allocation6 + $0x2c0] sm:$0xff]
    %v159 = vld [vmem:[#allocation6 + $0x2c8] sm:$0xff]
    %v160 = vld [vmem:[#allocation6 + $0x2d0] sm:$0xff]
    %v161 = vld [vmem:[#allocation6 + $0x2d8] sm:$0xff]
    %v162 = vld [vmem:[#allocation6 + $0x2e0] sm:$0xff]
    %v163 = vld [vmem:[#allocation6 + $0x2e8] sm:$0xff]
    %v164 = vld [vmem:[#allocation6 + $0x2f0] sm:$0xff]
    %v165 = vld [vmem:[#allocation6 + $0x2f8] sm:$0xff]
    %v166 = vld [vmem:[#allocation6 + $0x300] sm:$0xff]
    %v167 = vld [vmem:[#allocation6 + $0x308] sm:$0xff]
    %v168 = vld [vmem:[#allocation6 + $0x310] sm:$0xff]
    %v169 = vld [vmem:[#allocation6 + $0x318] sm:$0xff]
    %v170 = vld [vmem:[#allocation6 + $0x320] sm:$0xff]
    %v171 = vld [vmem:[#allocation6 + $0x328] sm:$0xff]
    %v172 = vld [vmem:[#allocation6 + $0x330] sm:$0xff]
    %v173 = vld [vmem:[#allocation6 + $0x338] sm:$0xff]
    %v174 = vld [vmem:[#allocation6 + $0x340] sm:$0xff]
    %v175 = vld [vmem:[#allocation6 + $0x348] sm:$0xff]
    %v176 = vld [vmem:[#allocation6 + $0x350] sm:$0xff]
    %v177 = vld [vmem:[#allocation6 + $0x358] sm:$0xff]
    %v178 = vld [vmem:[#allocation6 + $0x360] sm:$0xff]
    %v179 = vld [vmem:[#allocation6 + $0x368] sm:$0xff]
    %v180 = vld [vmem:[#allocation6 + $0x370] sm:$0xff]
    %v181 = vld [vmem:[#allocation6 + $0x378] sm:$0xff]
    %v182 = vld [vmem:[#allocation6 + $0x380] sm:$0xff]
    %v183 = vld [vmem:[#allocation6 + $0x388] sm:$0xff]
    %v184 = vld [vmem:[#allocation6 + $0x390] sm:$0xff]
    %v185 = vld [vmem:[#allocation6 + $0x398] sm:$0xff]
    %v186 = vld [vmem:[#allocation6 + $0x3a0] sm:$0xff]
    %v187 = vld [vmem:[#allocation6 + $0x3a8] sm:$0xff]
    %v188 = vld [vmem:[#allocation6 + $0x3b0] sm:$0xff]
    %v189 = vld [vmem:[#allocation6 + $0x3b8] sm:$0xff]
    %v190 = vld [vmem:[#allocation6 + $0x3c0] sm:$0xff]
    %v191 = vld [vmem:[#allocation6 + $0x3c8] sm:$0xff]
    %v192 = vld [vmem:[#allocation6 + $0x3d0] sm:$0xff]
    %v193 = vld [vmem:[#allocation6 + $0x3d8] sm:$0xff]
    %v194 = vld [vmem:[#allocation6 + $0x3e0] sm:$0xff]
    %v195 = vld [vmem:[#allocation6 + $0x3e8] sm:$0xff]
    %v196 = vld [vmem:[#allocation6 + $0x3f0] sm:$0xff]
    %v197 = vld [vmem:[#allocation6 + $0x3f8] sm:$0xff]
    %198 = vmatpush.msra.mxu0 %v190
    %199 = vmatpush.msra.mxu0 %v182
    %200 = vmatpush.msra.mxu0 %v174
    %201 = vmatpush.msra.mxu0 %v166
    %202 = vmatpush.msra.mxu0 %v158
    %203 = vmatpush.msra.mxu0 %v150
    %204 = vmatpush.msra.mxu0 %v142
    %205 = vmatpush.msra.mxu0 %v134
    %206 = vmatpush.msra.mxu0 %v126
    %207 = vmatpush.msra.mxu0 %v118
    %208 = vmatpush.msra.mxu0 %v110
    %209 = vmatpush.msra.mxu0 %v102
    %210 = vmatpush.msra.mxu0 %v94
    %211 = vmatpush.msra.mxu0 %v86
    %212 = vmatpush.msra.mxu0 %v78
    %213 = vmatpush.msra.mxu0 %v70
    %214 = vmatmul.f32.gmra.mxu0 %v68
    %v215 = vpop.f32.mrf.mxu0
    %v216 = vadd.f32 0.0, %v215
    %217 = vmatmul.f32.gmra.mxu0 %v69
    %v218 = vpop.f32.mrf.mxu0
    %v219 = vadd.f32 0.0, %v218
    %220 = vdwg.mxu0
    %221 = vmatpush.msra.mxu0 %v191
    %222 = vmatpush.msra.mxu0 %v183
    %223 = vmatpush.msra.mxu0 %v175
    %224 = vmatpush.msra.mxu0 %v167
    %225 = vmatpush.msra.mxu0 %v159
    %226 = vmatpush.msra.mxu0 %v151
    %227 = vmatpush.msra.mxu0 %v143
    %228 = vmatpush.msra.mxu0 %v135
    %229 = vmatpush.msra.mxu0 %v127
    %230 = vmatpush.msra.mxu0 %v119
    %231 = vmatpush.msra.mxu0 %v111
    %232 = vmatpush.msra.mxu0 %v103
    %233 = vmatpush.msra.mxu0 %v95
    %234 = vmatpush.msra.mxu0 %v87
    %235 = vmatpush.msra.mxu0 %v79
    %236 = vmatpush.msra.mxu0 %v71
    %237 = vmatmul.f32.gmra.mxu0 %v68
    %v238 = vpop.f32.mrf.mxu0
    %v239 = vadd.f32 0.0, %v238
    %240 = vmatmul.f32.gmra.mxu0 %v69
    %v241 = vpop.f32.mrf.mxu0
    %v242 = vadd.f32 0.0, %v241
    %243 = vdwg.mxu0
    %244 = vmatpush.msra.mxu0 %v192
    %245 = vmatpush.msra.mxu0 %v184
    %246 = vmatpush.msra.mxu0 %v176
    %247 = vmatpush.msra.mxu0 %v168
    %248 = vmatpush.msra.mxu0 %v160
    %249 = vmatpush.msra.mxu0 %v152
    %250 = vmatpush.msra.mxu0 %v144
    %251 = vmatpush.msra.mxu0 %v136
    %252 = vmatpush.msra.mxu0 %v128
    %253 = vmatpush.msra.mxu0 %v120
    %254 = vmatpush.msra.mxu0 %v112
    %255 = vmatpush.msra.mxu0 %v104
    %256 = vmatpush.msra.mxu0 %v96
    %257 = vmatpush.msra.mxu0 %v88
    %258 = vmatpush.msra.mxu0 %v80
    %259 = vmatpush.msra.mxu0 %v72
    %260 = vmatmul.f32.gmra.mxu0 %v68
    %v261 = vpop.f32.mrf.mxu0
    %v262 = vadd.f32 0.0, %v261
    %263 = vmatmul.f32.gmra.mxu0 %v69
    %v264 = vpop.f32.mrf.mxu0
    %v265 = vadd.f32 0.0, %v264
    %266 = vdwg.mxu0
    %267 = vmatpush.msra.mxu0 %v193
    %268 = vmatpush.msra.mxu0 %v185
    %269 = vmatpush.msra.mxu0 %v177
    %270 = vmatpush.msra.mxu0 %v169
    %271 = vmatpush.msra.mxu0 %v161
    %272 = vmatpush.msra.mxu0 %v153
    %273 = vmatpush.msra.mxu0 %v145
    %274 = vmatpush.msra.mxu0 %v137
    %275 = vmatpush.msra.mxu0 %v129
    %276 = vmatpush.msra.mxu0 %v121
    %277 = vmatpush.msra.mxu0 %v113
    %278 = vmatpush.msra.mxu0 %v105
    %279 = vmatpush.msra.mxu0 %v97
    %280 = vmatpush.msra.mxu0 %v89
    %281 = vmatpush.msra.mxu0 %v81
    %282 = vmatpush.msra.mxu0 %v73
    %283 = vmatmul.f32.gmra.mxu0 %v68
    %v284 = vpop.f32.mrf.mxu0
    %v285 = vadd.f32 0.0, %v284
    %286 = vmatmul.f32.gmra.mxu0 %v69
    %v287 = vpop.f32.mrf.mxu0
    %v288 = vadd.f32 0.0, %v287
    %289 = vdwg.mxu0
    %290 = vmatpush.msra.mxu0 %v194
    %291 = vmatpush.msra.mxu0 %v186
    %292 = vmatpush.msra.mxu0 %v178
    %293 = vmatpush.msra.mxu0 %v170
    %294 = vmatpush.msra.mxu0 %v162
    %295 = vmatpush.msra.mxu0 %v154
    %296 = vmatpush.msra.mxu0 %v146
    %297 = vmatpush.msra.mxu0 %v138
    %298 = vmatpush.msra.mxu0 %v130
    %299 = vmatpush.msra.mxu0 %v122
    %300 = vmatpush.msra.mxu0 %v114
    %301 = vmatpush.msra.mxu0 %v106
    %302 = vmatpush.msra.mxu0 %v98
    %303 = vmatpush.msra.mxu0 %v90
    %304 = vmatpush.msra.mxu0 %v82
    %305 = vmatpush.msra.mxu0 %v74
    %306 = vmatmul.f32.gmra.mxu0 %v68
    %v307 = vpop.f32.mrf.mxu0
    %v308 = vadd.f32 0.0, %v307
    %309 = vmatmul.f32.gmra.mxu0 %v69
    %v310 = vpop.f32.mrf.mxu0
    %v311 = vadd.f32 0.0, %v310
    %312 = vdwg.mxu0
    %313 = vmatpush.msra.mxu0 %v195
    %314 = vmatpush.msra.mxu0 %v187
    %315 = vmatpush.msra.mxu0 %v179
    %316 = vmatpush.msra.mxu0 %v171
    %317 = vmatpush.msra.mxu0 %v163
    %318 = vmatpush.msra.mxu0 %v155
    %319 = vmatpush.msra.mxu0 %v147
    %320 = vmatpush.msra.mxu0 %v139
    %321 = vmatpush.msra.mxu0 %v131
    %322 = vmatpush.msra.mxu0 %v123
    %323 = vmatpush.msra.mxu0 %v115
    %324 = vmatpush.msra.mxu0 %v107
    %325 = vmatpush.msra.mxu0 %v99
    %326 = vmatpush.msra.mxu0 %v91
    %327 = vmatpush.msra.mxu0 %v83
    %328 = vmatpush.msra.mxu0 %v75
    %329 = vmatmul.f32.gmra.mxu0 %v68
    %v330 = vpop.f32.mrf.mxu0
    %v331 = vadd.f32 0.0, %v330
    %332 = vmatmul.f32.gmra.mxu0 %v69
    %v333 = vpop.f32.mrf.mxu0
    %v334 = vadd.f32 0.0, %v333
    %335 = vdwg.mxu0
    %336 = vmatpush.msra.mxu0 %v196
    %337 = vmatpush.msra.mxu0 %v188
    %338 = vmatpush.msra.mxu0 %v180
    %339 = vmatpush.msra.mxu0 %v172
    %340 = vmatpush.msra.mxu0 %v164
    %341 = vmatpush.msra.mxu0 %v156
    %342 = vmatpush.msra.mxu0 %v148
    %343 = vmatpush.msra.mxu0 %v140
    %344 = vmatpush.msra.mxu0 %v132
    %345 = vmatpush.msra.mxu0 %v124
    %346 = vmatpush.msra.mxu0 %v116
    %347 = vmatpush.msra.mxu0 %v108
    %348 = vmatpush.msra.mxu0 %v100
    %349 = vmatpush.msra.mxu0 %v92
    %350 = vmatpush.msra.mxu0 %v84
    %351 = vmatpush.msra.mxu0 %v76
    %352 = vmatmul.f32.gmra.mxu0 %v68
    %v353 = vpop.f32.mrf.mxu0
    %v354 = vadd.f32 0.0, %v353
    %355 = vmatmul.f32.gmra.mxu0 %v69
    %v356 = vpop.f32.mrf.mxu0
    %v357 = vadd.f32 0.0, %v356
    %358 = vdwg.mxu0
    %359 = vmatpush.msra.mxu0 %v197
    %360 = vmatpush.msra.mxu0 %v189
    %361 = vmatpush.msra.mxu0 %v181
    %362 = vmatpush.msra.mxu0 %v173
    %363 = vmatpush.msra.mxu0 %v165
    %364 = vmatpush.msra.mxu0 %v157
    %365 = vmatpush.msra.mxu0 %v149
    %366 = vmatpush.msra.mxu0 %v141
    %367 = vmatpush.msra.mxu0 %v133
    %368 = vmatpush.msra.mxu0 %v125
    %369 = vmatpush.msra.mxu0 %v117
    %370 = vmatpush.msra.mxu0 %v109
    %371 = vmatpush.msra.mxu0 %v101
    %372 = vmatpush.msra.mxu0 %v93
    %373 = vmatpush.msra.mxu0 %v85
    %374 = vmatpush.msra.mxu0 %v77
    %375 = vmatmul.f32.gmra.mxu0 %v68
    %v376 = vpop.f32.mrf.mxu0
    %v377 = vadd.f32 0.0, %v376
    %378 = vmatmul.f32.gmra.mxu0 %v69
    %v379 = vpop.f32.mrf.mxu0
    %v380 = vadd.f32 0.0, %v379
    %381 = vdwg.mxu0
    %v382 = vxor.u32 %v216, 2147483648
    %v383 = vxor.u32 %v239, 2147483648
    %v384 = vxor.u32 %v262, 2147483648
    %v385 = vxor.u32 %v285, 2147483648
    %v386 = vxor.u32 %v219, 2147483648
    %v387 = vxor.u32 %v242, 2147483648
    %v388 = vxor.u32 %v265, 2147483648
    %v389 = vxor.u32 %v288, 2147483648
    %v390 = vmul.f32 %v382, 1.442695
    %v391 = vpow.pop %v390
    %v392 = vmul.f32 %v383, 1.442695
    %v393 = vpow.pop %v392
    %v394 = vmul.f32 %v384, 1.442695
    %v395 = vpow.pop %v394
    %v396 = vmul.f32 %v385, 1.442695
    %v397 = vpow.pop %v396
    %v398 = vmul.f32 %v386, 1.442695
    %v399 = vpow.pop %v398
    %v400 = vmul.f32 %v387, 1.442695
    %v401 = vpow.pop %v400
    %v402 = vmul.f32 %v388, 1.442695
    %v403 = vpow.pop %v402
    %v404 = vmul.f32 %v389, 1.442695
    %v405 = vpow.pop %v404
    %v406 = vadd.f32 %v391, 1.0
    %v407 = vadd.f32 %v393, 1.0
    %v408 = vadd.f32 %v395, 1.0
    %v409 = vadd.f32 %v397, 1.0
    %v410 = vadd.f32 %v399, 1.0
    %v411 = vadd.f32 %v401, 1.0
    %v412 = vadd.f32 %v403, 1.0
    %v413 = vadd.f32 %v405, 1.0
    %v414 = vrcp.pop %v406
    %v415 = vmul.f32 %v406, %v414
    %v416 = vsub.f32 1.0, %v415
    %v417 = vmul.f32 %v414, %v416
    %v418 = vadd.f32 %v414, %v417
    %vm419 = vweird.f32 %v406
    %vm420 = vweird.f32 %v414
    %vm421 = vmor %vm419, %vm420
    %v422 = vsel %vm421, %v414, %v418
    %v423 = vand.u32 2147483647, %v406
    %vm424 = vcmp.eq.f32.partialorder %v423, 8.507059e+37
    %v425 = vand.u32 %v406, 2147483648
    %v426 = vor.u32 1.1754944e-38, %v425
    %v427 = vsel %vm424, %v426, %v422
    %v428 = vmul.f32 1.0, %v427
    %v429 = vrcp.pop %v407
    %v430 = vmul.f32 %v407, %v429
    %v431 = vsub.f32 1.0, %v430
    %v432 = vmul.f32 %v429, %v431
    %v433 = vadd.f32 %v429, %v432
    %vm434 = vweird.f32 %v407
    %vm435 = vweird.f32 %v429
    %vm436 = vmor %vm434, %vm435
    %v437 = vsel %vm436, %v429, %v433
    %v438 = vand.u32 2147483647, %v407
    %vm439 = vcmp.eq.f32.partialorder %v438, 8.507059e+37
    %v440 = vand.u32 %v407, 2147483648
    %v441 = vor.u32 1.1754944e-38, %v440
    %v442 = vsel %vm439, %v441, %v437
    %v443 = vmul.f32 1.0, %v442
    %v444 = vrcp.pop %v408
    %v445 = vmul.f32 %v408, %v444
    %v446 = vsub.f32 1.0, %v445
    %v447 = vmul.f32 %v444, %v446
    %v448 = vadd.f32 %v444, %v447
    %vm449 = vweird.f32 %v408
    %vm450 = vweird.f32 %v444
    %vm451 = vmor %vm449, %vm450
    %v452 = vsel %vm451, %v444, %v448
    %v453 = vand.u32 2147483647, %v408
    %vm454 = vcmp.eq.f32.partialorder %v453, 8.507059e+37
    %v455 = vand.u32 %v408, 2147483648
    %v456 = vor.u32 1.1754944e-38, %v455
    %v457 = vsel %vm454, %v456, %v452
    %v458 = vmul.f32 1.0, %v457
    %v459 = vrcp.pop %v409
    %v460 = vmul.f32 %v409, %v459
    %v461 = vsub.f32 1.0, %v460
    %v462 = vmul.f32 %v459, %v461
    %v463 = vadd.f32 %v459, %v462
    %vm464 = vweird.f32 %v409
    %vm465 = vweird.f32 %v459
    %vm466 = vmor %vm464, %vm465
    %v467 = vsel %vm466, %v459, %v463
    %v468 = vand.u32 2147483647, %v409
    %vm469 = vcmp.eq.f32.partialorder %v468, 8.507059e+37
    %v470 = vand.u32 %v409, 2147483648
    %v471 = vor.u32 1.1754944e-38, %v470
    %v472 = vsel %vm469, %v471, %v467
    %v473 = vmul.f32 1.0, %v472
    %v474 = vrcp.pop %v410
    %v475 = vmul.f32 %v410, %v474
    %v476 = vsub.f32 1.0, %v475
    %v477 = vmul.f32 %v474, %v476
    %v478 = vadd.f32 %v474, %v477
    %vm479 = vweird.f32 %v410
    %vm480 = vweird.f32 %v474
    %vm481 = vmor %vm479, %vm480
    %v482 = vsel %vm481, %v474, %v478
    %v483 = vand.u32 2147483647, %v410
    %vm484 = vcmp.eq.f32.partialorder %v483, 8.507059e+37
    %v485 = vand.u32 %v410, 2147483648
    %v486 = vor.u32 1.1754944e-38, %v485
    %v487 = vsel %vm484, %v486, %v482
    %v488 = vmul.f32 1.0, %v487
    %v489 = vrcp.pop %v411
    %v490 = vmul.f32 %v411, %v489
    %v491 = vsub.f32 1.0, %v490
    %v492 = vmul.f32 %v489, %v491
    %v493 = vadd.f32 %v489, %v492
    %vm494 = vweird.f32 %v411
    %vm495 = vweird.f32 %v489
    %vm496 = vmor %vm494, %vm495
    %v497 = vsel %vm496, %v489, %v493
    %v498 = vand.u32 2147483647, %v411
    %vm499 = vcmp.eq.f32.partialorder %v498, 8.507059e+37
    %v500 = vand.u32 %v411, 2147483648
    %v501 = vor.u32 1.1754944e-38, %v500
    %v502 = vsel %vm499, %v501, %v497
    %v503 = vmul.f32 1.0, %v502
    %v504 = vrcp.pop %v412
    %v505 = vmul.f32 %v412, %v504
    %v506 = vsub.f32 1.0, %v505
    %v507 = vmul.f32 %v504, %v506
    %v508 = vadd.f32 %v504, %v507
    %vm509 = vweird.f32 %v412
    %vm510 = vweird.f32 %v504
    %vm511 = vmor %vm509, %vm510
    %v512 = vsel %vm511, %v504, %v508
    %v513 = vand.u32 2147483647, %v412
    %vm514 = vcmp.eq.f32.partialorder %v513, 8.507059e+37
    %v515 = vand.u32 %v412, 2147483648
    %v516 = vor.u32 1.1754944e-38, %v515
    %v517 = vsel %vm514, %v516, %v512
    %v518 = vmul.f32 1.0, %v517
    %v519 = vrcp.pop %v413
    %v520 = vmul.f32 %v413, %v519
    %v521 = vsub.f32 1.0, %v520
    %v522 = vmul.f32 %v519, %v521
    %v523 = vadd.f32 %v519, %v522
    %vm524 = vweird.f32 %v413
    %vm525 = vweird.f32 %v519
    %vm526 = vmor %vm524, %vm525
    %v527 = vsel %vm526, %v519, %v523
    %v528 = vand.u32 2147483647, %v413
    %vm529 = vcmp.eq.f32.partialorder %v528, 8.507059e+37
    %v530 = vand.u32 %v413, 2147483648
    %v531 = vor.u32 1.1754944e-38, %v530
    %v532 = vsel %vm529, %v531, %v527
    %v533 = vmul.f32 1.0, %v532
    %v534 = vmul.f32 %v216, %v428
    %v535 = vmul.f32 %v239, %v443
    %v536 = vmul.f32 %v262, %v458
    %v537 = vmul.f32 %v285, %v473
    %v538 = vmul.f32 %v219, %v488
    %v539 = vmul.f32 %v242, %v503
    %v540 = vmul.f32 %v265, %v518
    %v541 = vmul.f32 %v288, %v533
    %v542 = vmul.f32 %v534, %v308
    %v543 = vmul.f32 %v535, %v331
    %v544 = vmul.f32 %v536, %v354
    %v545 = vmul.f32 %v537, %v377
    %v546 = vmul.f32 %v538, %v311
    %v547 = vmul.f32 %v539, %v334
    %v548 = vmul.f32 %v540, %v357
    %v549 = vmul.f32 %v541, %v380
    %v550 = vld [vmem:[#allocation2] sm:$0xff]
    %v551 = vld [vmem:[#allocation2 + $0x8] sm:$0xff]
    %v552 = vld [vmem:[#allocation8] sm:$0xff]
    %v553 = vld [vmem:[#allocation8 + $0x8] sm:$0xff]
    %v554 = vld [vmem:[#allocation8 + $0x10] sm:$0xff]
    %v555 = vld [vmem:[#allocation8 + $0x18] sm:$0xff]
    %v556 = vld [vmem:[#allocation8 + $0x20] sm:$0xff]
    %v557 = vld [vmem:[#allocation8 + $0x28] sm:$0xff]
    %v558 = vld [vmem:[#allocation8 + $0x30] sm:$0xff]
    %v559 = vld [vmem:[#allocation8 + $0x38] sm:$0xff]
    %v560 = vld [vmem:[#allocation8 + $0x40] sm:$0xff]
    %v561 = vld [vmem:[#allocation8 + $0x48] sm:$0xff]
    %v562 = vld [vmem:[#allocation8 + $0x50] sm:$0xff]
    %v563 = vld [vmem:[#allocation8 + $0x58] sm:$0xff]
    %v564 = vld [vmem:[#allocation8 + $0x60] sm:$0xff]
    %v565 = vld [vmem:[#allocation8 + $0x68] sm:$0xff]
    %v566 = vld [vmem:[#allocation8 + $0x70] sm:$0xff]
    %v567 = vld [vmem:[#allocation8 + $0x78] sm:$0xff]
    %v568 = vld [vmem:[#allocation8 + $0x80] sm:$0xff]
    %v569 = vld [vmem:[#allocation8 + $0x88] sm:$0xff]
    %v570 = vld [vmem:[#allocation8 + $0x90] sm:$0xff]
    %v571 = vld [vmem:[#allocation8 + $0x98] sm:$0xff]
    %v572 = vld [vmem:[#allocation8 + $0xa0] sm:$0xff]
    %v573 = vld [vmem:[#allocation8 + $0xa8] sm:$0xff]
    %v574 = vld [vmem:[#allocation8 + $0xb0] sm:$0xff]
    %v575 = vld [vmem:[#allocation8 + $0xb8] sm:$0xff]
    %v576 = vld [vmem:[#allocation8 + $0xc0] sm:$0xff]
    %v577 = vld [vmem:[#allocation8 + $0xc8] sm:$0xff]
    %v578 = vld [vmem:[#allocation8 + $0xd0] sm:$0xff]
    %v579 = vld [vmem:[#allocation8 + $0xd8] sm:$0xff]
    %v580 = vld [vmem:[#allocation8 + $0xe0] sm:$0xff]
    %v581 = vld [vmem:[#allocation8 + $0xe8] sm:$0xff]
    %v582 = vld [vmem:[#allocation8 + $0xf0] sm:$0xff]
    %v583 = vld [vmem:[#allocation8 + $0xf8] sm:$0xff]
    %v584 = vld [vmem:[#allocation8 + $0x100] sm:$0xff]
    %v585 = vld [vmem:[#allocation8 + $0x108] sm:$0xff]
    %v586 = vld [vmem:[#allocation8 + $0x110] sm:$0xff]
    %v587 = vld [vmem:[#allocation8 + $0x118] sm:$0xff]
    %v588 = vld [vmem:[#allocation8 + $0x120] sm:$0xff]
    %v589 = vld [vmem:[#allocation8 + $0x128] sm:$0xff]
    %v590 = vld [vmem:[#allocation8 + $0x130] sm:$0xff]
    %v591 = vld [vmem:[#allocation8 + $0x138] sm:$0xff]
    %v592 = vld [vmem:[#allocation8 + $0x140] sm:$0xff]
    %v593 = vld [vmem:[#allocation8 + $0x148] sm:$0xff]
    %v594 = vld [vmem:[#allocation8 + $0x150] sm:$0xff]
    %v595 = vld [vmem:[#allocation8 + $0x158] sm:$0xff]
    %v596 = vld [vmem:[#allocation8 + $0x160] sm:$0xff]
    %v597 = vld [vmem:[#allocation8 + $0x168] sm:$0xff]
    %v598 = vld [vmem:[#allocation8 + $0x170] sm:$0xff]
    %v599 = vld [vmem:[#allocation8 + $0x178] sm:$0xff]
    %v600 = vld [vmem:[#allocation8 + $0x180] sm:$0xff]
    %v601 = vld [vmem:[#allocation8 + $0x188] sm:$0xff]
    %v602 = vld [vmem:[#allocation8 + $0x190] sm:$0xff]
    %v603 = vld [vmem:[#allocation8 + $0x198] sm:$0xff]
    %v604 = vld [vmem:[#allocation8 + $0x1a0] sm:$0xff]
    %v605 = vld [vmem:[#allocation8 + $0x1a8] sm:$0xff]
    %v606 = vld [vmem:[#allocation8 + $0x1b0] sm:$0xff]
    %v607 = vld [vmem:[#allocation8 + $0x1b8] sm:$0xff]
    %v608 = vld [vmem:[#allocation8 + $0x1c0] sm:$0xff]
    %v609 = vld [vmem:[#allocation8 + $0x1c8] sm:$0xff]
    %v610 = vld [vmem:[#allocation8 + $0x1d0] sm:$0xff]
    %v611 = vld [vmem:[#allocation8 + $0x1d8] sm:$0xff]
    %v612 = vld [vmem:[#allocation8 + $0x1e0] sm:$0xff]
    %v613 = vld [vmem:[#allocation8 + $0x1e8] sm:$0xff]
    %v614 = vld [vmem:[#allocation8 + $0x1f0] sm:$0xff]
    %v615 = vld [vmem:[#allocation8 + $0x1f8] sm:$0xff]
    %616 = vmatpush.msra.mxu0 %v567
    %617 = vmatpush.msra.mxu0 %v566
    %618 = vmatpush.msra.mxu0 %v565
    %619 = vmatpush.msra.mxu0 %v564
    %620 = vmatpush.msra.mxu0 %v563
    %621 = vmatpush.msra.mxu0 %v562
    %622 = vmatpush.msra.mxu0 %v561
    %623 = vmatpush.msra.mxu0 %v560
    %624 = vmatpush.msra.mxu0 %v559
    %625 = vmatpush.msra.mxu0 %v558
    %626 = vmatpush.msra.mxu0 %v557
    %627 = vmatpush.msra.mxu0 %v556
    %628 = vmatpush.msra.mxu0 %v555
    %629 = vmatpush.msra.mxu0 %v554
    %630 = vmatpush.msra.mxu0 %v553
    %631 = vmatpush.msra.mxu0 %v552
    %632 = vmatmul.f32.gmra.mxu0 %v542
    %v633 = vpop.f32.mrf.mxu0
    %v634 = vadd.f32 0.0, %v633
    %635 = vmatmul.f32.gmra.mxu0 %v546
    %v636 = vpop.f32.mrf.mxu0
    %v637 = vadd.f32 0.0, %v636
    %638 = vdwg.mxu0
    %639 = vmatpush.msra.mxu0 %v583
    %640 = vmatpush.msra.mxu0 %v582
    %641 = vmatpush.msra.mxu0 %v581
    %642 = vmatpush.msra.mxu0 %v580
    %643 = vmatpush.msra.mxu0 %v579
    %644 = vmatpush.msra.mxu0 %v578
    %645 = vmatpush.msra.mxu0 %v577
    %646 = vmatpush.msra.mxu0 %v576
    %647 = vmatpush.msra.mxu0 %v575
    %648 = vmatpush.msra.mxu0 %v574
    %649 = vmatpush.msra.mxu0 %v573
    %650 = vmatpush.msra.mxu0 %v572
    %651 = vmatpush.msra.mxu0 %v571
    %652 = vmatpush.msra.mxu0 %v570
    %653 = vmatpush.msra.mxu0 %v569
    %654 = vmatpush.msra.mxu0 %v568
    %655 = vmatmul.f32.gmra.mxu0 %v543
    %v656 = vpop.f32.mrf.mxu0
    %v657 = vadd.f32 %v634, %v656
    %658 = vmatmul.f32.gmra.mxu0 %v547
    %v659 = vpop.f32.mrf.mxu0
    %v660 = vadd.f32 %v637, %v659
    %661 = vdwg.mxu0
    %662 = vmatpush.msra.mxu0 %v599
    %663 = vmatpush.msra.mxu0 %v598
    %664 = vmatpush.msra.mxu0 %v597
    %665 = vmatpush.msra.mxu0 %v596
    %666 = vmatpush.msra.mxu0 %v595
    %667 = vmatpush.msra.mxu0 %v594
    %668 = vmatpush.msra.mxu0 %v593
    %669 = vmatpush.msra.mxu0 %v592
    %670 = vmatpush.msra.mxu0 %v591
    %671 = vmatpush.msra.mxu0 %v590
    %672 = vmatpush.msra.mxu0 %v589
    %673 = vmatpush.msra.mxu0 %v588
    %674 = vmatpush.msra.mxu0 %v587
    %675 = vmatpush.msra.mxu0 %v586
    %676 = vmatpush.msra.mxu0 %v585
    %677 = vmatpush.msra.mxu0 %v584
    %678 = vmatmul.f32.gmra.mxu0 %v544
    %v679 = vpop.f32.mrf.mxu0
    %v680 = vadd.f32 %v657, %v679
    %681 = vmatmul.f32.gmra.mxu0 %v548
    %v682 = vpop.f32.mrf.mxu0
    %v683 = vadd.f32 %v660, %v682
    %684 = vdwg.mxu0
    %685 = vmatpush.msra.mxu0 %v615
    %686 = vmatpush.msra.mxu0 %v614
    %687 = vmatpush.msra.mxu0 %v613
    %688 = vmatpush.msra.mxu0 %v612
    %689 = vmatpush.msra.mxu0 %v611
    %690 = vmatpush.msra.mxu0 %v610
    %691 = vmatpush.msra.mxu0 %v609
    %692 = vmatpush.msra.mxu0 %v608
    %693 = vmatpush.msra.mxu0 %v607
    %694 = vmatpush.msra.mxu0 %v606
    %695 = vmatpush.msra.mxu0 %v605
    %696 = vmatpush.msra.mxu0 %v604
    %697 = vmatpush.msra.mxu0 %v603
    %698 = vmatpush.msra.mxu0 %v602
    %699 = vmatpush.msra.mxu0 %v601
    %700 = vmatpush.msra.mxu0 %v600
    %701 = vmatmul.f32.gmra.mxu0 %v545
    %v702 = vpop.f32.mrf.mxu0
    %v703 = vadd.f32 %v680, %v702
    %704 = vmatmul.f32.gmra.mxu0 %v549
    %v705 = vpop.f32.mrf.mxu0
    %v706 = vadd.f32 %v683, %v705
    %707 = vdwg.mxu0
    %v708 = vadd.f32 %v550, %v703
    %v709 = vadd.f32 %v551, %v706
    %710 = vst [vmem:[#allocation2] sm:$0xff] %v708
    %711 = vst [vmem:[#allocation2 + $0x8] sm:$0xff] %v709
    // Predicated region
    $region30: #{_ffn_forward.1} parent=1 // pred_check
      %p712 = pneg %p62
    $region31: #{_ffn_forward.1} parent=1 // pred_check_branch
      %714 = sbr.rel (%p712) target = $region33
    $region32: #{_ffn_forward.1} parent=1 // pred_region
      %v715 = vld [vmem:[#allocation2] sm:$0xff]
      %v716 = vld [vmem:[#allocation2 + $0x8] sm:$0xff]
      %717 = vst [vmem:[#allocation9] sm:$0xff] %v715
      %718 = vst [vmem:[#allocation9 + $0x8] sm:$0xff] %v716
    $region33: #{_ffn_forward.1} parent=1 // pred_fallthru
      _
    // Predicated region
    $region34: #{_ffn_forward.1} parent=1 // pred_check
      _
    $region35: #{_ffn_forward.1} parent=1 // pred_check_branch
      %720 = sbr.rel (0) target = $region37
    $region36: #{_ffn_forward.1} parent=1 // pred_region
      %722 = vsyncadd [#allocation5], 0
      %s723 = sshll.u32 [#allocation9], 4
      %s724 = int_to_ptr.vmem [resolvable:$true] %s723
      %s725 = sshll.u32 %s3, 4
      %s726 = int_to_ptr.hbm [resolvable:$true] %s725
      %731 = dma.vmem_to_hbm [thread:$0]  %s724, 256, %s726, [#allocation5], 128, 128, 8
    $region37: #{_ffn_forward.1} parent=1 // pred_fallthru
      _
    // Predicated region
    $region38: #{_ffn_forward.1} parent=1 // pred_check
      _
    $region39: #{_ffn_forward.1} parent=1 // pred_check_branch
      %733 = sbr.rel (0) target = $region41
    $region40: #{_ffn_forward.1} parent=1 // pred_region
      %735 = dma.done [#allocation5], 256
    $region41: #{_ffn_forward.1} parent=1 // pred_fallthru
      _
    %736 = vsyncpa [#allocation4], 1
    %737 = vsyncpa [#allocation7], 1
    %738 = vsyncpa [#allocation5], 1

</llo_original>
